<compile_context>
chip_gen: v5e
topology: v5e:2x2
jax: 0.10.0
libtpu: 0.0.40
codegen_flags: <defaults>
</compile_context>

<pallas_src>
import jax
import jax.numpy as jnp
import numpy as np
from jax import lax
from jax.experimental import pallas as pl
from jax.experimental.pallas import tpu as pltpu

# Wikipedia RGB -> YUV coefficients (AnimeGAN `_rgb_to_yuv_kernel`; column k of
# the matrix gives the (r, g, b) weights of output channel k).
_Y_W = (0.299, 0.587, 0.114)
_U_W = (-0.14714119, -0.28886916, 0.43601035)
_V_W = (0.61497538, -0.51496512, -0.10001026)


def _huber(d):
    # PyTorch SmoothL1Loss with beta = 1.0 (per element, before mean).
    ad = jnp.abs(d)
    return jnp.where(ad < 1.0, 0.5 * d * d, ad - 0.5)


def _make_color_loss_kernel(rows_valid, tr):
    """rows_valid = total valid (sublane) rows, tr = rows per grid step."""

    def kernel(a_ref, b_ref, o_ref):
        # a_ref, b_ref: (3, tr, 128) f32 RGB planes of one spatial tile of
        #               image n.
        # o_ref:        (1, 128)     f32 per-lane partial sums, resident across
        #                            the spatial-tile grid axis (accumulator).
        i = pl.program_id(1)

        # rgb_to_yuv applies x -> (x + 1) / 2 then a linear map; the +1 offset
        # cancels in the difference, so convert the halved RGB diff directly.
        dr = (a_ref[0] - b_ref[0]) * 0.5
        dg = (a_ref[1] - b_ref[1]) * 0.5
        db = (a_ref[2] - b_ref[2]) * 0.5

        dy = _Y_W[0] * dr + _Y_W[1] * dg + _Y_W[2] * db
        du = _U_W[0] * dr + _U_W[1] * dg + _U_W[2] * db
        dv = _V_W[0] * dr + _V_W[1] * dg + _V_W[2] * db

        per_pixel = jnp.abs(dy) + _huber(du) + _huber(dv)      # (tr, 128) VPU

        if rows_valid % tr != 0:
            # Ragged last tile: zero out rows past the end of the image so the
            # out-of-bounds garbage of the partial block contributes nothing.
            row = lax.broadcasted_iota(jnp.int32, per_pixel.shape, 0)
            per_pixel = jnp.where(row < rows_valid - i * tr, per_pixel, 0.0)

        partial = jnp.sum(per_pixel, axis=0, keepdims=True)    # (1, 128)  XLU

        @pl.when(i == 0)
        def _():
            o_ref[...] = jnp.zeros_like(o_ref)

        o_ref[...] += partial

    return kernel


def color_loss(image, image_g, *, tile_rows=512):
    """AnimeGAN ColorLoss for NCHW float images; returns a scalar float32."""
    N, C, H, W = image.shape
    assert C == 3 and image_g.shape == image.shape
    n_pix = H * W

    a = image.astype(jnp.float32).reshape(N, 3, n_pix)
    b = image_g.astype(jnp.float32).reshape(N, 3, n_pix)

    # Lane-dense layout: only pad when H*W is not a multiple of 128 (this is
    # the only case that forces an HBM copy; zero padding on BOTH inputs gives
    # a zero difference -> contributes 0 to the loss).
    lane_pad = (-n_pix) % 128
    if lane_pad:
        a = jnp.pad(a, ((0, 0), (0, 0), (0, lane_pad)))
        b = jnp.pad(b, ((0, 0), (0, 0), (0, lane_pad)))
    rows = (n_pix + lane_pad) // 128
    a = a.reshape(N, 3, rows, 128)
    b = b.reshape(N, 3, rows, 128)

    # Row tile: multiple of 8 sublanes, or the full row extent for tiny images
    # ("equal to full dim" satisfies the (8, 128) block constraint).
    tile_rows = max(8, (tile_rows // 8) * 8)
    tr = rows if rows <= tile_rows else tile_rows
    num_tiles = pl.cdiv(rows, tr)

    partials = pl.pallas_call(
        _make_color_loss_kernel(rows, tr),
        out_shape=jax.ShapeDtypeStruct((N, 1, 128), jnp.float32),
        grid=(N, num_tiles),
        in_specs=[
            pl.BlockSpec((None, 3, tr, 128), lambda n, i: (n, 0, i, 0)),
            pl.BlockSpec((None, 3, tr, 128), lambda n, i: (n, 0, i, 0)),
        ],
        out_specs=pl.BlockSpec((None, 1, 128), lambda n, i: (n, 0, 0)),
        compiler_params=pltpu.CompilerParams(
            dimension_semantics=("parallel", "arbitrary")),
    )(a, b)

    # Each of the three loss terms is a mean over N*H*W elements.
    return jnp.sum(partials) / jnp.float32(N * n_pix)


# ---------------------------------------------------------------------------
# Pure-JAX reference mirroring the PyTorch module exactly (for validation).
# ---------------------------------------------------------------------------
_RGB_TO_YUV = np.array([[0.299, -0.14714119, 0.61497538],
                        [0.587, -0.28886916, -0.51496512],
                        [0.114, 0.43601035, -0.10001026]], np.float32)


def _rgb_to_yuv_ref(img_nchw):
    x = (img_nchw.astype(jnp.float32) + 1.0) / 2.0
    # tensordot over the channel dim -> channel-last (N, H, W, 3)
    return jnp.tensordot(x, jnp.asarray(_RGB_TO_YUV), axes=([1], [0]))


def _color_loss_ref(image, image_g):
    ya = _rgb_to_yuv_ref(image)
    yb = _rgb_to_yuv_ref(image_g)
    d = ya - yb
    return (jnp.mean(jnp.abs(d[..., 0]))
            + jnp.mean(_huber(d[..., 1]))
            + jnp.mean(_huber(d[..., 2])))


if __name__ == "__main__":
    key = jax.random.PRNGKey(0)
    k1, k2 = jax.random.split(key)
    # NCHW images in [-1, 1], like the AnimeGAN training pipeline.
    image = jax.random.uniform(k1, (2, 3, 16, 16), jnp.float32,
                               minval=-1.0, maxval=1.0)
    image_g = jax.random.uniform(k2, (2, 3, 16, 16), jnp.float32,
                                 minval=-1.0, maxval=1.0)

    out = jax.block_until_ready(color_loss(image, image_g))
    ref = jax.block_until_ready(_color_loss_ref(image, image_g))
    np.testing.assert_allclose(np.asarray(out), np.asarray(ref),
                               rtol=1e-5, atol=1e-6)

    # Second config: ragged row count (H*W/128 not a multiple of the row tile)
    # exercises the in-kernel mask path.
    k3, k4 = jax.random.split(k2)
    img2 = jax.random.uniform(k3, (2, 3, 40, 32), jnp.float32,
                              minval=-1.0, maxval=1.0)
    img2_g = jax.random.uniform(k4, (2, 3, 40, 32), jnp.float32,
                                minval=-1.0, maxval=1.0)
    out2 = jax.block_until_ready(color_loss(img2, img2_g, tile_rows=8))
    ref2 = jax.block_until_ready(_color_loss_ref(img2, img2_g))
    np.testing.assert_allclose(np.asarray(out2), np.asarray(ref2),
                               rtol=1e-5, atol=1e-6)

    print("KERNEL_OK")
</pallas_src>

<mosaic_0001>
module attributes {stable_mosaic.version = 11 : i64} {
  func.func @kernel(%arg0: i32, %arg1: i32, %arg2: memref<1x3x2x128xf32, #tpu.memory_space<vmem>>, %arg3: memref<1x3x2x128xf32, #tpu.memory_space<vmem>>, %arg4: memref<1x1x128xf32, #tpu.memory_space<vmem>>) attributes {dimension_semantics = [#tpu.dimension_semantics<parallel>, #tpu.dimension_semantics<arbitrary>], iteration_bounds = array<i64: 2, 1>, scalar_prefetch = 0 : i64, scratch_operands = 0 : i64, tpu.core_type = #tpu.core_type<tc>, window_params = [{transform_indices = @transform_0, window_bounds = array<i64: 1, 3, 2, 128>}, {transform_indices = @transform_1, window_bounds = array<i64: 1, 3, 2, 128>}, {transform_indices = @transform_2, window_bounds = array<i64: 1, 1, 128>}]} {
    %c0 = arith.constant 0 : index
    %c0_0 = arith.constant 0 : index
    %c0_1 = arith.constant 0 : index
    %c0_2 = arith.constant 0 : index
    %0 = vector.load %arg2[%c0, %c0_0, %c0_1, %c0_2] : memref<1x3x2x128xf32, #tpu.memory_space<vmem>>, vector<1x1x2x128xf32>
    %1 = vector.shape_cast %0 : vector<1x1x2x128xf32> to vector<2x128xf32>
    %c0_3 = arith.constant 0 : index
    %c0_4 = arith.constant 0 : index
    %c0_5 = arith.constant 0 : index
    %c0_6 = arith.constant 0 : index
    %2 = vector.load %arg3[%c0_3, %c0_4, %c0_5, %c0_6] : memref<1x3x2x128xf32, #tpu.memory_space<vmem>>, vector<1x1x2x128xf32>
    %3 = vector.shape_cast %2 : vector<1x1x2x128xf32> to vector<2x128xf32>
    %4 = arith.subf %1, %3 : vector<2x128xf32>
    %cst = arith.constant 5.000000e-01 : f32
    %5 = vector.broadcast %cst : f32 to vector<2x128xf32>
    %6 = arith.mulf %4, %5 : vector<2x128xf32>
    %c0_7 = arith.constant 0 : index
    %c1 = arith.constant 1 : index
    %c0_8 = arith.constant 0 : index
    %c0_9 = arith.constant 0 : index
    %7 = vector.load %arg2[%c0_7, %c1, %c0_8, %c0_9] : memref<1x3x2x128xf32, #tpu.memory_space<vmem>>, vector<1x1x2x128xf32>
    %8 = vector.shape_cast %7 : vector<1x1x2x128xf32> to vector<2x128xf32>
    %c0_10 = arith.constant 0 : index
    %c1_11 = arith.constant 1 : index
    %c0_12 = arith.constant 0 : index
    %c0_13 = arith.constant 0 : index
    %9 = vector.load %arg3[%c0_10, %c1_11, %c0_12, %c0_13] : memref<1x3x2x128xf32, #tpu.memory_space<vmem>>, vector<1x1x2x128xf32>
    %10 = vector.shape_cast %9 : vector<1x1x2x128xf32> to vector<2x128xf32>
    %11 = arith.subf %8, %10 : vector<2x128xf32>
    %cst_14 = arith.constant 5.000000e-01 : f32
    %12 = vector.broadcast %cst_14 : f32 to vector<2x128xf32>
    %13 = arith.mulf %11, %12 : vector<2x128xf32>
    %c0_15 = arith.constant 0 : index
    %c2 = arith.constant 2 : index
    %c0_16 = arith.constant 0 : index
    %c0_17 = arith.constant 0 : index
    %14 = vector.load %arg2[%c0_15, %c2, %c0_16, %c0_17] : memref<1x3x2x128xf32, #tpu.memory_space<vmem>>, vector<1x1x2x128xf32>
    %15 = vector.shape_cast %14 : vector<1x1x2x128xf32> to vector<2x128xf32>
    %c0_18 = arith.constant 0 : index
    %c2_19 = arith.constant 2 : index
    %c0_20 = arith.constant 0 : index
    %c0_21 = arith.constant 0 : index
    %16 = vector.load %arg3[%c0_18, %c2_19, %c0_20, %c0_21] : memref<1x3x2x128xf32, #tpu.memory_space<vmem>>, vector<1x1x2x128xf32>
    %17 = vector.shape_cast %16 : vector<1x1x2x128xf32> to vector<2x128xf32>
    %18 = arith.subf %15, %17 : vector<2x128xf32>
    %cst_22 = arith.constant 5.000000e-01 : f32
    %19 = vector.broadcast %cst_22 : f32 to vector<2x128xf32>
    %20 = arith.mulf %18, %19 : vector<2x128xf32>
    %cst_23 = arith.constant 2.990000e-01 : f32
    %21 = vector.broadcast %cst_23 : f32 to vector<2x128xf32>
    %22 = arith.mulf %21, %6 : vector<2x128xf32>
    %cst_24 = arith.constant 5.870000e-01 : f32
    %23 = vector.broadcast %cst_24 : f32 to vector<2x128xf32>
    %24 = arith.mulf %23, %13 : vector<2x128xf32>
    %25 = arith.addf %22, %24 : vector<2x128xf32>
    %cst_25 = arith.constant 1.140000e-01 : f32
    %26 = vector.broadcast %cst_25 : f32 to vector<2x128xf32>
    %27 = arith.mulf %26, %20 : vector<2x128xf32>
    %28 = arith.addf %25, %27 : vector<2x128xf32>
    %cst_26 = arith.constant -0.147141188 : f32
    %29 = vector.broadcast %cst_26 : f32 to vector<2x128xf32>
    %30 = arith.mulf %29, %6 : vector<2x128xf32>
    %cst_27 = arith.constant -0.288869172 : f32
    %31 = vector.broadcast %cst_27 : f32 to vector<2x128xf32>
    %32 = arith.mulf %31, %13 : vector<2x128xf32>
    %33 = arith.addf %30, %32 : vector<2x128xf32>
    %cst_28 = arith.constant 0.436010361 : f32
    %34 = vector.broadcast %cst_28 : f32 to vector<2x128xf32>
    %35 = arith.mulf %34, %20 : vector<2x128xf32>
    %36 = arith.addf %33, %35 : vector<2x128xf32>
    %cst_29 = arith.constant 0.614975392 : f32
    %37 = vector.broadcast %cst_29 : f32 to vector<2x128xf32>
    %38 = arith.mulf %37, %6 : vector<2x128xf32>
    %cst_30 = arith.constant -0.514965117 : f32
    %39 = vector.broadcast %cst_30 : f32 to vector<2x128xf32>
    %40 = arith.mulf %39, %13 : vector<2x128xf32>
    %41 = arith.addf %38, %40 : vector<2x128xf32>
    %cst_31 = arith.constant -0.100010261 : f32
    %42 = vector.broadcast %cst_31 : f32 to vector<2x128xf32>
    %43 = arith.mulf %42, %20 : vector<2x128xf32>
    %44 = arith.addf %41, %43 : vector<2x128xf32>
    %45 = math.absf %28 : vector<2x128xf32>
    %46 = math.absf %36 : vector<2x128xf32>
    %cst_32 = arith.constant 1.000000e+00 : f32
    %47 = vector.broadcast %cst_32 : f32 to vector<2x128xf32>
    %48 = arith.cmpf olt, %46, %47 : vector<2x128xf32>
    %cst_33 = arith.constant 5.000000e-01 : f32
    %49 = vector.broadcast %cst_33 : f32 to vector<2x128xf32>
    %50 = arith.mulf %49, %36 : vector<2x128xf32>
    %51 = arith.mulf %50, %36 : vector<2x128xf32>
    %cst_34 = arith.constant 5.000000e-01 : f32
    %52 = vector.broadcast %cst_34 : f32 to vector<2x128xf32>
    %53 = arith.subf %46, %52 : vector<2x128xf32>
    %54 = arith.select %48, %51, %53 : vector<2x128xi1>, vector<2x128xf32>
    %55 = arith.addf %45, %54 : vector<2x128xf32>
    %56 = math.absf %44 : vector<2x128xf32>
    %cst_35 = arith.constant 1.000000e+00 : f32
    %57 = vector.broadcast %cst_35 : f32 to vector<2x128xf32>
    %58 = arith.cmpf olt, %56, %57 : vector<2x128xf32>
    %cst_36 = arith.constant 5.000000e-01 : f32
    %59 = vector.broadcast %cst_36 : f32 to vector<2x128xf32>
    %60 = arith.mulf %59, %44 : vector<2x128xf32>
    %61 = arith.mulf %60, %44 : vector<2x128xf32>
    %cst_37 = arith.constant 5.000000e-01 : f32
    %62 = vector.broadcast %cst_37 : f32 to vector<2x128xf32>
    %63 = arith.subf %56, %62 : vector<2x128xf32>
    %64 = arith.select %58, %61, %63 : vector<2x128xi1>, vector<2x128xf32>
    %65 = arith.addf %55, %64 : vector<2x128xf32>
    %cst_38 = arith.constant dense<0.000000e+00> : vector<128xf32>
    %66 = vector.multi_reduction <add>, %65, %cst_38 [0] : vector<2x128xf32> to vector<128xf32>
    %67 = vector.shape_cast %66 : vector<128xf32> to vector<1x128xf32>
    %c0_i32 = arith.constant 0 : i32
    %68 = arith.cmpi eq, %arg1, %c0_i32 : i32
    %69 = arith.extui %68 : i1 to i32
    %c0_i32_39 = arith.constant 0 : i32
    %70 = arith.cmpi ne, %69, %c0_i32_39 : i32
    scf.if %70 {
      %cst_46 = arith.constant 0.000000e+00 : f32
      %77 = vector.broadcast %cst_46 : f32 to vector<1x128xf32>
      %c0_47 = arith.constant 0 : index
      %c0_48 = arith.constant 0 : index
      %c0_49 = arith.constant 0 : index
      %78 = vector.load %arg4[%c0_47, %c0_48, %c0_49] : memref<1x1x128xf32, #tpu.memory_space<vmem>>, vector<1x1x128xf32>
      %79 = vector.shape_cast %78 : vector<1x1x128xf32> to vector<1x128xf32>
      %80 = vector.shape_cast %77 : vector<1x128xf32> to vector<1x1x128xf32>
      tpu.vector_store %arg4[%c0_47, %c0_48, %c0_49], %80 {strides = array<i32>} : memref<1x1x128xf32, #tpu.memory_space<vmem>>, vector<1x1x128xf32>,
    } else {
    }
    %c0_40 = arith.constant 0 : index
    %c0_41 = arith.constant 0 : index
    %c0_42 = arith.constant 0 : index
    %71 = vector.load %arg4[%c0_40, %c0_41, %c0_42] : memref<1x1x128xf32, #tpu.memory_space<vmem>>, vector<1x1x128xf32>
    %72 = vector.shape_cast %71 : vector<1x1x128xf32> to vector<1x128xf32>
    %73 = arith.addf %72, %67 : vector<1x128xf32>
    %c0_43 = arith.constant 0 : index
    %c0_44 = arith.constant 0 : index
    %c0_45 = arith.constant 0 : index
    %74 = vector.load %arg4[%c0_43, %c0_44, %c0_45] : memref<1x1x128xf32, #tpu.memory_space<vmem>>, vector<1x1x128xf32>
    %75 = vector.shape_cast %74 : vector<1x1x128xf32> to vector<1x128xf32>
    %76 = vector.shape_cast %73 : vector<1x128xf32> to vector<1x1x128xf32>
    tpu.vector_store %arg4[%c0_43, %c0_44, %c0_45], %76 {strides = array<i32>} : memref<1x1x128xf32, #tpu.memory_space<vmem>>, vector<1x1x128xf32>,
    return
  }
  func.func @transform_0(%arg0: i32, %arg1: i32) -> (i32, i32, i32, i32) {
    %c0_i32 = arith.constant 0 : i32
    %c0_i32_0 = arith.constant 0 : i32
    %c0_i32_1 = arith.constant 0 : i32
    return %arg0, %c0_i32, %arg1, %c0_i32_0 : i32, i32, i32, i32
  }
  func.func @transform_1(%arg0: i32, %arg1: i32) -> (i32, i32, i32, i32) {
    %c0_i32 = arith.constant 0 : i32
    %c0_i32_0 = arith.constant 0 : i32
    %c0_i32_1 = arith.constant 0 : i32
    return %arg0, %c0_i32, %arg1, %c0_i32_0 : i32, i32, i32, i32
  }
  func.func @transform_2(%arg0: i32, %arg1: i32) -> (i32, i32, i32) {
    %c0_i32 = arith.constant 0 : i32
    %c0_i32_0 = arith.constant 0 : i32
    %c0_i32_1 = arith.constant 0 : i32
    return %arg0, %c0_i32, %c0_i32_0 : i32, i32, i32
  }
}

</mosaic_0001>

<llo_original>
// kernel: tpu_custom_call.1
$region0: #{tpu_custom_call.1}
  #allocation0 [shape = 'u32[]', space=smem, size = 0x4, offset = 0x4, fixed_abs, tag = 'smem constant byte address 0x4 - core index']
  #allocation1 [shape = 'u32[72,128]{1,0:T(1,128)}', space=vmem, size = 0x9000, scoped, tag = 'internal scratch']
  %s0 = inlined_call_operand.hbm [shape: f32[2,3,2,128], index: 0, kind: input, shape index: {}]
  %s1 = inlined_call_operand.hbm [shape: f32[2,3,2,128], index: 1, kind: input, shape index: {}]
  %s2 = inlined_call_operand.hbm [shape: f32[2,1,128], index: 2, kind: output, shape index: {}]
  %s3 = sld [smem:[#allocation0]]
  $region53: #{tpu_custom_call.1} parent=0
    _
  %s5 = ssub.s32 1, %s3
  %s6 = scalar_select 0, %s5, %s3
  $region1: #{tpu_custom_call.1} parent=0
    #allocation2 [shape = 'u8[6144]{0}', space=vmem, size = 0x1800, scoped, tag = 'input window, operand 0']
    #allocation3 [shape = 's32[2]{0}', space=sflag, size = 0x8, scoped, tag = 'scoped memory for tpu_custom_call.1']
    #allocation4 [shape = 's32[2]{0}', space=sflag, size = 0x8, scoped, tag = 'scoped memory for tpu_custom_call.1']
    #allocation5 [shape = 'u8[6144]{0}', space=vmem, size = 0x1800, scoped, tag = 'input window, operand 1']
    #allocation6 [shape = 's32[2]{0}', space=sflag, size = 0x8, scoped, tag = 'scoped memory for tpu_custom_call.1']
    #allocation7 [shape = 'u8[1024]{0}', space=vmem, size = 0x400, scoped, tag = 'output window, operand 0']
    %7 = vsyncpa [#allocation3], 0
    %s8 = scalar_lea.sflag [#allocation3], 1
    %9 = vsyncpa %s8, 0
    %10 = vsyncpa [#allocation6], 0
    %s11 = scalar_lea.sflag [#allocation6], 1
    %12 = vsyncpa %s11, 0
    %13 = vsyncpa [#allocation4], 0
    %s14 = scalar_lea.sflag [#allocation4], 1
    %15 = vsyncpa %s14, 0
    loop: start=0, step=1, limit=4
    $region2: #{tpu_custom_call.1} parent=1 // loop_pre_header
      _
    $region3: #{tpu_custom_call.1} parent=1 // loop_header
      %s17 = sphi 0, %s21
      %p18 = scmp.ge.s32.totalorder %s17, 4
      %s24 = sphi 0, %s36
      %s25 = sphi 0, %s32
      %s26 = sphi 0, %s24
      %s27 = sphi 0, %s25
      %s28 = sphi 0, %s26
      %s29 = sphi 0, %s27
      %s41 = sphi 0, %s43
      %s44 = sphi 0, %s41
      %s45 = sphi 0, %s44
      %s61 = sphi 0, %s45
      %s69 = sphi 0, %s71
      %s72 = sphi 0, %s69
      %s73 = sphi 0, %s72
      %s89 = sphi 0, %s73
      %s95 = sphi 0, %s97
      %s98 = sphi 0, %s95
      %s99 = sphi 0, %s98
      %s115 = sphi 0, %s99
    $region4: #{tpu_custom_call.1} parent=1 // loop_header_branch
      %20 = sbr.rel (%p18) target = $region8
    $region5: #{tpu_custom_call.1} parent=1 // loop_body
      %s22 = ssub.s32 %s17, 1
      %s23 = ssub.s32 %s17, 2
      %s30 = sadd.s32 1, %s25
      %p31 = scmp.ge.s32.totalorder %s30, 1
      %s32 = scalar_select %p31, 0, %s30
      %s33 = sadd.s32 1, %s24
      %s34 = scalar_select %p31, %s33, %s24
      %p35 = scmp.ge.s32.totalorder %s34, 2
      %s36 = scalar_select %p35, 0, %s34
      %s37 = ssub.s32 %s24, %s36
      %s38 = ssub.s32 %s25, %s32
      %s39 = sor.u32 %s37, %s38
      %p40 = scmp.eq.s32.totalorder %s39, 0
      %s42 = sadd.s32 %s41, 1
      %s43 = scalar_select %p40, %s41, %s42
      %p46 = pneg %p40
      %p47 = scmp.eq.s32.totalorder %s17, 1
      %p48 = por %p46, %p47
      %p49 = scmp.ne.s32.totalorder %s41, %s44
      %p50 = scmp.eq.s32.totalorder %s17, 0
      %p51 = por %p49, %p50
      %p52 = scmp.ne.s32.totalorder %s41, %s44
      %p53 = scmp.eq.s32.totalorder %s22, 1
      %p54 = por %p52, %p53
      %p55 = scmp.ne.s32.totalorder %s44, %s45
      %p56 = scmp.eq.s32.totalorder %s22, 0
      %p57 = por %p55, %p56
      %p58 = scmp.ne.s32.totalorder %s44, %s45
      %p59 = scmp.eq.s32.totalorder %s23, 1
      %p60 = por %p58, %p59
      %p62 = scmp.ne.s32.totalorder %s45, %s61
      %p63 = scmp.eq.s32.totalorder %s23, 0
      %p64 = por %p62, %p63
      %s65 = ssub.s32 %s24, %s36
      %s66 = ssub.s32 %s25, %s32
      %s67 = sor.u32 %s65, %s66
      %p68 = scmp.eq.s32.totalorder %s67, 0
      %s70 = sadd.s32 %s69, 1
      %s71 = scalar_select %p68, %s69, %s70
      %p74 = pneg %p68
      %p75 = scmp.eq.s32.totalorder %s17, 1
      %p76 = por %p74, %p75
      %p77 = scmp.ne.s32.totalorder %s69, %s72
      %p78 = scmp.eq.s32.totalorder %s17, 0
      %p79 = por %p77, %p78
      %p80 = scmp.ne.s32.totalorder %s69, %s72
      %p81 = scmp.eq.s32.totalorder %s22, 1
      %p82 = por %p80, %p81
      %p83 = scmp.ne.s32.totalorder %s72, %s73
      %p84 = scmp.eq.s32.totalorder %s22, 0
      %p85 = por %p83, %p84
      %p86 = scmp.ne.s32.totalorder %s72, %s73
      %p87 = scmp.eq.s32.totalorder %s23, 1
      %p88 = por %p86, %p87
      %p90 = scmp.ne.s32.totalorder %s73, %s89
      %p91 = scmp.eq.s32.totalorder %s23, 0
      %p92 = por %p90, %p91
      %s93 = ssub.s32 %s24, %s36
      %p94 = scmp.eq.s32.totalorder %s93, 0
      %s96 = sadd.s32 %s95, 1
      %s97 = scalar_select %p94, %s95, %s96
      %p100 = pneg %p94
      %p101 = scmp.eq.s32.totalorder %s17, 1
      %p102 = por %p100, %p101
      %p103 = scmp.ne.s32.totalorder %s95, %s98
      %p104 = scmp.eq.s32.totalorder %s17, 0
      %p105 = por %p103, %p104
      %p106 = scmp.ne.s32.totalorder %s95, %s98
      %p107 = scmp.eq.s32.totalorder %s22, 1
      %p108 = por %p106, %p107
      %p109 = scmp.ne.s32.totalorder %s98, %s99
      %p110 = scmp.eq.s32.totalorder %s22, 0
      %p111 = por %p109, %p110
      %p112 = scmp.ne.s32.totalorder %s98, %s99
      %p113 = scmp.eq.s32.totalorder %s23, 1
      %p114 = por %p112, %p113
      %p116 = scmp.ne.s32.totalorder %s99, %s115
      %p117 = scmp.eq.s32.totalorder %s23, 0
      %p118 = por %p116, %p117
      %p119 = scmp.le.s32.totalorder 1, %s17
      %p120 = scmp.lt.s32.totalorder %s17, 3
      %p121 = pnand %p119, %p120
      %p122 = pneg %p121
      // Predicated region
      $region9: #{tpu_custom_call.1} parent=5 // pred_check
        _
      $region10: #{tpu_custom_call.1} parent=5 // pred_check_branch
        %124 = sbr.rel (%p121) target = $region12
      $region11: #{tpu_custom_call.1} parent=5 // pred_region
        %s125 = ssub.s32 %s17, 1
      $region12: #{tpu_custom_call.1} parent=5 // pred_fallthru
        _
      %p126 = scmp.lt.s32.totalorder %s17, 2
      // Predicated region
      $region13: #{tpu_custom_call.1} parent=5 // pred_check
        %p127 = pneg %p126
      $region14: #{tpu_custom_call.1} parent=5 // pred_check_branch
        %129 = sbr.rel (%p127) target = $region16
      $region15: #{tpu_custom_call.1} parent=5 // pred_region
        // Predicated region
        $region17: #{tpu_custom_call.1} parent=15 // pred_check
          %p130 = pneg %p51
        $region18: #{tpu_custom_call.1} parent=15 // pred_check_branch
          %132 = sbr.rel (%p130) target = $region20
        $region19: #{tpu_custom_call.1} parent=15 // pred_region
          %s133 = sand.u32 %s41, 1
          %s134 = scalar_lea.sflag [#allocation3], %s133
          %s135 = sand.u32 %s41, 1
          %s136 = smul.addr %s135, 6
          %s137 = scalar_lea.vmem [#allocation2], %s136
          %139 = vsyncadd %s134, 0
          %s140 = smul.addr %s24, 3
          %s141 = sadd.s32 %s25, %s140
          %s142 = smul.addr %s141, 2
          %s143 = scalar_lea.hbm %s0, %s142
          %s144 = sshll.u32 %s143, 4
          %s145 = int_to_ptr.hbm [resolvable:$true] %s144
          %s146 = sshll.u32 %s137, 4
          %s147 = int_to_ptr.vmem [resolvable:$true] %s146
          %152 = dma.hbm_to_vmem [thread:$0]  %s145, 96, %s147, %s134, 32, 32, 2
        $region20: #{tpu_custom_call.1} parent=15 // pred_fallthru
          _
        // Predicated region
        $region21: #{tpu_custom_call.1} parent=15 // pred_check
          %p153 = pneg %p79
        $region22: #{tpu_custom_call.1} parent=15 // pred_check_branch
          %155 = sbr.rel (%p153) target = $region24
        $region23: #{tpu_custom_call.1} parent=15 // pred_region
          %s156 = sand.u32 %s69, 1
          %s157 = scalar_lea.sflag [#allocation6], %s156
          %s158 = sand.u32 %s69, 1
          %s159 = smul.addr %s158, 6
          %s160 = scalar_lea.vmem [#allocation5], %s159
          %162 = vsyncadd %s157, 0
          %s163 = smul.addr %s24, 3
          %s164 = sadd.s32 %s25, %s163
          %s165 = smul.addr %s164, 2
          %s166 = scalar_lea.hbm %s1, %s165
          %s167 = sshll.u32 %s166, 4
          %s168 = int_to_ptr.hbm [resolvable:$true] %s167
          %s169 = sshll.u32 %s160, 4
          %s170 = int_to_ptr.vmem [resolvable:$true] %s169
          %175 = dma.hbm_to_vmem [thread:$0]  %s168, 96, %s170, %s157, 32, 32, 2
        $region24: #{tpu_custom_call.1} parent=15 // pred_fallthru
          _
      $region16: #{tpu_custom_call.1} parent=5 // pred_fallthru
        _
      %p176 = scmp.le.s32.totalorder 1, %s17
      %p177 = scmp.lt.s32.totalorder %s17, 3
      %p178 = pnand %p176, %p177
      %p179 = pneg %p178
      // Predicated region
      $region25: #{tpu_custom_call.1} parent=5 // pred_check
        _
      $region26: #{tpu_custom_call.1} parent=5 // pred_check_branch
        %181 = sbr.rel (%p178) target = $region28
      $region27: #{tpu_custom_call.1} parent=5 // pred_region
        %s182 = ssub.s32 %s17, 1
        %s183 = sand.u32 %s44, 1
        %s184 = scalar_lea.sflag [#allocation3], %s183
        %s185 = sand.u32 %s44, 1
        %s186 = smul.addr %s185, 6
        %s187 = scalar_lea.vmem [#allocation2], %s186
        // Predicated region
        $region29: #{tpu_custom_call.1} parent=27 // pred_check
          %p188 = pneg %p57
        $region30: #{tpu_custom_call.1} parent=27 // pred_check_branch
          %190 = sbr.rel (%p188) target = $region32
        $region31: #{tpu_custom_call.1} parent=27 // pred_region
          %192 = dma.done %s184, 96
        $region32: #{tpu_custom_call.1} parent=27 // pred_fallthru
          _
        %s193 = sand.u32 %s72, 1
        %s194 = scalar_lea.sflag [#allocation6], %s193
        %s195 = sand.u32 %s72, 1
        %s196 = smul.addr %s195, 6
        %s197 = scalar_lea.vmem [#allocation5], %s196
        // Predicated region
        $region33: #{tpu_custom_call.1} parent=27 // pred_check
          %p198 = pneg %p85
        $region34: #{tpu_custom_call.1} parent=27 // pred_check_branch
          %200 = sbr.rel (%p198) target = $region36
        $region35: #{tpu_custom_call.1} parent=27 // pred_region
          %202 = dma.done %s194, 96
        $region36: #{tpu_custom_call.1} parent=27 // pred_fallthru
          _
        %s203 = sand.u32 %s44, 1
        %s204 = scalar_lea.sflag [#allocation3], %s203
        %s205 = sand.u32 %s44, 1
        %s206 = smul.addr %s205, 6
        %s207 = scalar_lea.vmem [#allocation2], %s206
        %p208 = pneg %p57
        %p209 = pneg %p54
        %s210 = sand.u32 %s72, 1
        %s211 = scalar_lea.sflag [#allocation6], %s210
        %s212 = sand.u32 %s72, 1
        %s213 = smul.addr %s212, 6
        %s214 = scalar_lea.vmem [#allocation5], %s213
        %p215 = pneg %p85
        %p216 = pneg %p82
        %p217 = pneg %p111
        %p218 = pneg %p108
        %s219 = sand.u32 %s98, 1
        %s220 = scalar_lea.sflag [#allocation4], %s219
        %s221 = sand.u32 %s98, 1
        %s222 = scalar_lea.vmem [#allocation7], %s221
        %v223 = vld [vmem:[%s187] sm:$0x3]
        %v224 = vld [vmem:[%s197] sm:$0x3]
        %v225 = vsub.f32 %v223, %v224
        %v226 = vmul.f32 %v225, 0.5
        %s227 = scalar_lea.vmem %s187, 2 [#allocation2]
        %v228 = vld [vmem:[%s227] sm:$0x3]
        %s229 = scalar_lea.vmem %s197, 2 [#allocation5]
        %v230 = vld [vmem:[%s229] sm:$0x3]
        %v231 = vsub.f32 %v228, %v230
        %v232 = vmul.f32 %v231, 0.5
        %s233 = scalar_lea.vmem %s187, 4 [#allocation2]
        %v234 = vld [vmem:[%s233] sm:$0x3]
        %s235 = scalar_lea.vmem %s197, 4 [#allocation5]
        %v236 = vld [vmem:[%s235] sm:$0x3]
        %v237 = vsub.f32 %v234, %v236
        %v238 = vmul.f32 %v237, 0.5
        %v239 = vmul.f32 %v226, 0.299
        %v240 = vmul.f32 %v232, 0.587
        %v241 = vadd.f32 %v239, %v240
        %v242 = vmul.f32 %v238, 0.114
        %v243 = vadd.f32 %v241, %v242
        %v244 = vmul.f32 %v226, -0.14714119
        %v245 = vmul.f32 %v232, -0.28886917
        %v246 = vadd.f32 %v244, %v245
        %v247 = vmul.f32 %v238, 0.43601036
        %v248 = vadd.f32 %v246, %v247
        %v249 = vmul.f32 %v226, 0.6149754
        %v250 = vmul.f32 %v232, -0.5149651
        %v251 = vadd.f32 %v249, %v250
        %v252 = vmul.f32 %v238, -0.10001026
        %v253 = vadd.f32 %v251, %v252
        %v254 = vand.u32 2147483647, %v243
        %v255 = vand.u32 2147483647, %v248
        %vm256 = vcmp.lt.f32.partialorder %v255, 1.0
        %v257 = vmul.f32 %v248, 0.5
        %v258 = vmul.f32 %v257, %v248
        %v259 = vsub.f32 %v255, 0.5
        %v260 = vsel %vm256, %v258, %v259
        %v261 = vadd.f32 %v254, %v260
        %v262 = vand.u32 2147483647, %v253
        %vm263 = vcmp.lt.f32.partialorder %v262, 1.0
        %v264 = vmul.f32 %v253, 0.5
        %v265 = vmul.f32 %v264, %v253
        %v266 = vsub.f32 %v262, 0.5
        %v267 = vsel %vm263, %v265, %v266
        %v268 = vadd.f32 %v261, %v267
        %vm269 = vcmask 1041408
        %v270 = vsel %vm269, %v268, 0.0
        %v271 = vrot.slane %v270, 4
        %v272 = vadd.f32 %v270, %v271
        %v273 = vrot.slane %v272, 2
        %v274 = vadd.f32 %v272, %v273
        %v275 = vrot.slane %v274, 1
        %v276 = vadd.f32 %v274, %v275
        %p277 = scmp.eq.s32.totalorder %s27, 0
        // Predicated region
        $region37: #{tpu_custom_call.1} parent=27 // pred_check
          %p278 = pneg %p277
        $region38: #{tpu_custom_call.1} parent=27 // pred_check_branch
          %280 = sbr.rel (%p278) target = $region40
        $region39: #{tpu_custom_call.1} parent=27 // pred_region
          %281 = vst [vmem:[%s222] sm:$0x1] 0.0
        $region40: #{tpu_custom_call.1} parent=27 // pred_fallthru
          _
        %v282 = vld [vmem:[%s222] sm:$0x1]
        %v283 = vadd.f32 %v282, %v276
        %284 = vst [vmem:[%s222] sm:$0x1] %v283
        %s285 = sand.u32 %s98, 1
        %s286 = scalar_lea.sflag [#allocation4], %s285
        %s287 = sand.u32 %s98, 1
        %s288 = scalar_lea.vmem [#allocation7], %s287
        // Predicated region
        $region41: #{tpu_custom_call.1} parent=27 // pred_check
          %p289 = pneg %p108
        $region42: #{tpu_custom_call.1} parent=27 // pred_check_branch
          %291 = sbr.rel (%p289) target = $region44
        $region43: #{tpu_custom_call.1} parent=27 // pred_region
          %293 = vsyncadd %s286, 0
          %s294 = scalar_lea.hbm %s2, %s26
          %s296 = sshll.u32 %s288, 4
          %s297 = int_to_ptr.vmem [resolvable:$true] %s296
          %s298 = sshll.u32 %s294, 4
          %s299 = int_to_ptr.hbm [resolvable:$true] %s298
          %301 = dma.vmem_to_hbm [thread:$0]  %s297, 16, %s299, %s286
        $region44: #{tpu_custom_call.1} parent=27 // pred_fallthru
          _
      $region28: #{tpu_custom_call.1} parent=5 // pred_fallthru
        _
      %p302 = scmp.le.s32.totalorder 2, %s17
      // Predicated region
      $region45: #{tpu_custom_call.1} parent=5 // pred_check
        %p303 = pneg %p302
      $region46: #{tpu_custom_call.1} parent=5 // pred_check_branch
        %305 = sbr.rel (%p303) target = $region48
      $region47: #{tpu_custom_call.1} parent=5 // pred_region
        %s306 = ssub.s32 %s17, 2
        // Predicated region
        $region49: #{tpu_custom_call.1} parent=47 // pred_check
          %p307 = pneg %p114
        $region50: #{tpu_custom_call.1} parent=47 // pred_check_branch
          %309 = sbr.rel (%p307) target = $region52
        $region51: #{tpu_custom_call.1} parent=47 // pred_region
          %s310 = sand.u32 %s99, 1
          %s311 = scalar_lea.sflag [#allocation4], %s310
          %s312 = sand.u32 %s99, 1
          %s313 = scalar_lea.vmem [#allocation7], %s312
          %315 = dma.done %s311, 16
        $region52: #{tpu_custom_call.1} parent=47 // pred_fallthru
          _
      $region48: #{tpu_custom_call.1} parent=5 // pred_fallthru
        _
    $region6: #{tpu_custom_call.1} parent=1 // loop_footer
      %s21 = sadd.s32 1, %s17
    $region7: #{tpu_custom_call.1} parent=1 // loop_footer_branch
      %16 = sbr.rel target = $region3
    $region8: #{tpu_custom_call.1} parent=1 // loop_exit
      _
    %316 = vsyncpa [#allocation3], 1
    %s317 = scalar_lea.sflag [#allocation3], 1
    %318 = vsyncpa %s317, 1
    %319 = vsyncpa [#allocation6], 1
    %s320 = scalar_lea.sflag [#allocation6], 1
    %321 = vsyncpa %s320, 1
    %322 = vsyncpa [#allocation4], 1
    %s323 = scalar_lea.sflag [#allocation4], 1
    %324 = vsyncpa %s323, 1

</llo_original>
